<compile_context>
chip_gen: v7x
topology: tpu7x:2x2x1
jax: 0.10.0
libtpu: 0.0.40
codegen_flags: <defaults>
</compile_context>

<pallas_src>
import functools
import math

import jax
import jax.numpy as jnp
from jax.experimental import pallas as pl
from jax.experimental.pallas import tpu as pltpu


def _round_up(x, m):
    return ((x + m - 1) // m) * m


def _cdiv(a, b):
    return -(-a // b)


def _elu(x):
    # ELU(alpha=1): x if x > 0 else exp(x) - 1.
    # TODO(synk): torch's ELU uses expm1; exp(x)-1 loses a few bits near 0
    # (far below the verification tolerance) but lowers cleanly on all gens.
    return jnp.where(x > 0, x, jnp.exp(x) - 1.0)


# ---------------------------------------------------------------------------
# Kernel
# ---------------------------------------------------------------------------
def rescal_mlp_kernel(heads_ref, tails_ref,
                      w1h_ref, w1t_ref, b1_ref,
                      w2_ref, b2_ref,
                      w3_ref, b3_ref,
                      out_ref, *, bf16_elementwise):
    """One (TM, 256) batch tile: L2-normalize heads/tails, concat-free MLP."""
    cdt = w1h_ref.dtype                                 # matmul operand dtype
    edt = cdt if bf16_elementwise else jnp.float32      # elementwise dtype

    h = heads_ref[...]
    t = tails_ref[...]

    # --- L2 normalize.  Sum-of-squares + rsqrt kept in fp32 for accuracy;
    # only the (TM,1) scale is cast, so no (TM,256) fp32 copy of h/t is
    # materialized.  rsqrt lowers to the EUP (its own VLIW slot).
    eps2 = 1e-24                                        # torch eps=1e-12, squared
    h_ss = jnp.sum(jnp.square(h.astype(jnp.float32)), axis=-1, keepdims=True)
    t_ss = jnp.sum(jnp.square(t.astype(jnp.float32)), axis=-1, keepdims=True)
    h = h * jax.lax.rsqrt(jnp.maximum(h_ss, eps2)).astype(h.dtype)
    t = t * jax.lax.rsqrt(jnp.maximum(t_ss, eps2)).astype(t.dtype)

    # --- Linear(512 -> 256) on cat([h, t], 1) without materializing the concat:
    #     cat(h, t) @ W1 == h @ W1[:256, :] + t @ W1[256:, :]   (fp32 acc)
    x = (jnp.dot(h.astype(cdt), w1h_ref[...], preferred_element_type=jnp.float32)
         + jnp.dot(t.astype(cdt), w1t_ref[...], preferred_element_type=jnp.float32))
    x = _elu(x.astype(edt) + b1_ref[...].astype(edt))   # Dropout(eval) == id

    # --- Linear(256 -> 128) + ELU + Dropout(identity) ---
    x = jnp.dot(x.astype(cdt), w2_ref[...], preferred_element_type=jnp.float32)
    x = _elu(x.astype(edt) + b2_ref[...].astype(edt))

    # --- Linear(128 -> 3), padded to 128 output lanes (cols 3..127 are zero) ---
    x = jnp.dot(x.astype(cdt), w3_ref[...], preferred_element_type=jnp.float32)
    out_ref[...] = (x + b3_ref[...]).astype(out_ref.dtype)


# ---------------------------------------------------------------------------
# Parameters
# ---------------------------------------------------------------------------
def init_params(key, n_rels, n_features):
    """Deterministic parameter init mirroring the module's __init__ shapes."""
    del n_features
    ks = jax.random.split(key, 8)

    # nn.Embedding(n_rels, 64*64) with xavier_uniform_ (unused by the scores).
    xav = math.sqrt(6.0 / (n_rels + 64 * 64))
    rel_emb = jax.random.uniform(ks[0], (n_rels, 64 * 64), jnp.float32, -xav, xav)

    def linear(kw, kb, fan_in, fan_out):
        bound = 1.0 / math.sqrt(fan_in)
        # stored as (in, out) so the kernel computes x @ W + b
        w = jax.random.uniform(kw, (fan_in, fan_out), jnp.float32, -bound, bound)
        b = jax.random.uniform(kb, (fan_out,), jnp.float32, -bound, bound)
        return w, b

    w1, b1 = linear(ks[1], ks[2], 512, 256)
    w2, b2 = linear(ks[3], ks[4], 256, 128)
    w3, b3 = linear(ks[5], ks[6], 128, 3)

    return dict(rel_emb=rel_emb, w1=w1, b1=b1, w2=w2, b2=b2, w3=w3, b3=b3)


def prepare_kernel_params(params, compute_dtype=jnp.bfloat16):
    """Hoisted, kernel-ready weights: W1 split, biases reshaped, W3 lane-padded.

    Done once at init time so the per-call wrapper emits no slice/reshape/pad ops.
    """
    w1 = params["w1"]
    w3p = jnp.zeros((128, 128), jnp.float32).at[:, :3].set(params["w3"])
    b3p = jnp.zeros((1, 128), jnp.float32).at[:, :3].set(params["b3"])
    return dict(
        w1h=w1[:256, :].astype(compute_dtype),          # (256, 256)
        w1t=w1[256:, :].astype(compute_dtype),          # (256, 256)
        b1=params["b1"].reshape(1, 256).astype(jnp.float32),
        w2=params["w2"].astype(compute_dtype),          # (256, 128)
        b2=params["b2"].reshape(1, 128).astype(jnp.float32),
        w3=w3p.astype(compute_dtype),                   # (128, 128) zero-padded
        b3=b3p,                                         # (1, 128)  zero-padded
        compute_dtype=compute_dtype,
    )


# ---------------------------------------------------------------------------
# Forward wrapper
# ---------------------------------------------------------------------------
def rescal_forward(kparams, heads, tails, rels, alpha_scores, *, tm=2048,
                   bf16_elementwise=True):
    """Returns fp32 scores of shape (B, 3)."""
    del rels, alpha_scores   # do not contribute to the returned scores
    compute_dtype = kparams["compute_dtype"]
    in_bytes = jnp.dtype(compute_dtype).itemsize

    B = heads.shape[0]
    heads = heads.reshape(B, 256)
    tails = tails.reshape(B, 256)

    # Batch tiling:
    #   * large tiles amortize the ~0.35 us fixed per-grid-step overhead,
    #   * clamp so there are >=2 grid steps whenever B allows it (v7x dual-TC
    #     sharding of the "parallel" axis),
    #   * tm stays a multiple of 16 (bf16 sublane packing).
    # Padded zero rows normalize to zero (eps guard) and are sliced off.
    tm = max(16, min(tm, _round_up(_cdiv(max(B, 1), 2), 16)))
    Bp = _round_up(B, tm)
    if Bp != B:
        pad = Bp - B
        heads = jnp.pad(heads, ((0, pad), (0, 0)))
        tails = jnp.pad(tails, ((0, pad), (0, 0)))
    heads = heads.astype(compute_dtype)
    tails = tails.astype(compute_dtype)

    grid = (Bp // tm,)
    batch_spec = pl.BlockSpec((tm, 256), lambda i: (i, 0))
    # Weights/biases stay put (constant index_map -> VMEM-resident).
    # Note: pl.Buffered(1) would drop their second buffer (~330 KB VMEM);
    # skipped since total VMEM is ~10-15 MiB at tm=2048, far from the limit.
    resident = lambda shape: pl.BlockSpec(shape, lambda i: (0, 0))

    # Advisory cost estimate for the XLA scheduler.
    flops = Bp * 2 * (512 * 256 + 256 * 128 + 128 * 128)
    transcendentals = Bp * (2 + 256 + 128)      # 2 rsqrt + worst-case ELU exps
    weight_bytes = ((2 * 256 * 256 + 256 * 128 + 128 * 128) * in_bytes
                    + (256 + 128 + 128) * 4)
    bytes_accessed = (Bp * 2 * 256 * in_bytes           # bf16 input streams
                      + Bp * 128 * 2                    # bf16 padded output
                      + weight_bytes)

    kernel = functools.partial(rescal_mlp_kernel,
                               bf16_elementwise=bf16_elementwise)

    out = pl.pallas_call(
        kernel,
        # bf16 padded output: only 3/128 lanes are real data, so halving the
        # writeback bytes is the biggest per-row HBM saving (kernel is
        # HBM-bound on v6e); layout stays lane-dense -> unmasked vst.
        out_shape=jax.ShapeDtypeStruct((Bp, 128), jnp.bfloat16),
        grid_spec=pltpu.PrefetchScalarGridSpec(
            num_scalar_prefetch=0,
            grid=grid,
            in_specs=[
                batch_spec,              # heads  (TM, 256)
                batch_spec,              # tails  (TM, 256)
                resident((256, 256)),    # w1h
                resident((256, 256)),    # w1t
                resident((1, 256)),      # b1
                resident((256, 128)),    # w2
                resident((1, 128)),      # b2
                resident((128, 128)),    # w3 (lane-padded)
                resident((1, 128)),      # b3 (lane-padded)
            ],
            out_specs=pl.BlockSpec((tm, 128), lambda i: (i, 0)),
        ),
        compiler_params=pltpu.CompilerParams(
            dimension_semantics=("parallel",)),
        cost_estimate=pl.CostEstimate(flops=flops,
                                      transcendentals=transcendentals,
                                      bytes_accessed=bytes_accessed),
    )(heads, tails,
      kparams["w1h"], kparams["w1t"], kparams["b1"],
      kparams["w2"], kparams["b2"],
      kparams["w3"], kparams["b3"])

    # Slice the 3 real columns; upcast for callers expecting fp32 scores.
    return out[:B, :3].astype(jnp.float32)


# ---------------------------------------------------------------------------
# Pure-JAX fp32 reference (mirrors the PyTorch forward)
# ---------------------------------------------------------------------------
def rescal_reference(params, heads, tails, rels, alpha_scores):
    del rels, alpha_scores

    def norm(x):
        return x / jnp.maximum(
            jnp.sqrt(jnp.sum(x * x, axis=-1, keepdims=True)), 1e-12)

    def elu(x):
        return jnp.where(x > 0.0, x, jnp.exp(x) - 1.0)

    h = norm(heads).reshape(-1, 256)
    t = norm(tails).reshape(-1, 256)
    x = jnp.concatenate([h, t], axis=1)
    x = elu(x @ params["w1"] + params["b1"])
    x = elu(x @ params["w2"] + params["b2"])
    x = x @ params["w3"] + params["b3"]
    return x


if __name__ == "__main__":
    key = jax.random.PRNGKey(0)
    k_param, k_h, k_t, k_r, k_a = jax.random.split(key, 5)

    n_rels = 10
    n_features = 256
    B = 8

    params = init_params(k_param, n_rels, n_features)
    kparams = prepare_kernel_params(params, compute_dtype=jnp.bfloat16)

    heads = jax.random.normal(k_h, (B, 256), jnp.float32)
    tails = jax.random.normal(k_t, (B, 256), jnp.float32)
    rels = jax.random.randint(k_r, (B,), 0, n_rels, jnp.int32)
    alpha_scores = jax.random.normal(k_a, (B,), jnp.float32)  # unused, as in the module

    out = rescal_forward(kparams, heads, tails, rels, alpha_scores)
    out = jax.block_until_ready(out)

    ref = rescal_reference(params, heads, tails, rels, alpha_scores)
    assert out.shape == (B, 3), out.shape
    # bf16 streams / bf16 elementwise / bf16 output vs fp32 reference: loose tol.
    assert jnp.allclose(out, ref, atol=1e-2, rtol=1e-2), (out, ref)

    print("KERNEL_OK")
</pallas_src>

<mosaic_0001>
module attributes {stable_mosaic.version = 11 : i64} {
  func.func @rescal_mlp_kernel(%arg0: i32, %arg1: memref<16x256xbf16, #tpu.memory_space<vmem>>, %arg2: memref<16x256xbf16, #tpu.memory_space<vmem>>, %arg3: memref<256x256xbf16, #tpu.memory_space<vmem>>, %arg4: memref<256x256xbf16, #tpu.memory_space<vmem>>, %arg5: memref<1x256xf32, #tpu.memory_space<vmem>>, %arg6: memref<256x128xbf16, #tpu.memory_space<vmem>>, %arg7: memref<1x128xf32, #tpu.memory_space<vmem>>, %arg8: memref<128x128xbf16, #tpu.memory_space<vmem>>, %arg9: memref<1x128xf32, #tpu.memory_space<vmem>>, %arg10: memref<16x128xbf16, #tpu.memory_space<vmem>>) attributes {dimension_semantics = [#tpu.dimension_semantics<parallel>], iteration_bounds = array<i64: 1>, scalar_prefetch = 0 : i64, scratch_operands = 0 : i64, tpu.core_type = #tpu.core_type<tc>, window_params = [{transform_indices = @transform_0, window_bounds = array<i64: 16, 256>}, {transform_indices = @transform_1, window_bounds = array<i64: 16, 256>}, {pipeline_mode = #tpu.pipeline_mode<synchronous>, transform_indices = @transform_2, window_bounds = array<i64: 256, 256>}, {pipeline_mode = #tpu.pipeline_mode<synchronous>, transform_indices = @transform_3, window_bounds = array<i64: 256, 256>}, {pipeline_mode = #tpu.pipeline_mode<synchronous>, transform_indices = @transform_4, window_bounds = array<i64: 1, 256>}, {pipeline_mode = #tpu.pipeline_mode<synchronous>, transform_indices = @transform_5, window_bounds = array<i64: 256, 128>}, {pipeline_mode = #tpu.pipeline_mode<synchronous>, transform_indices = @transform_6, window_bounds = array<i64: 1, 128>}, {pipeline_mode = #tpu.pipeline_mode<synchronous>, transform_indices = @transform_7, window_bounds = array<i64: 128, 128>}, {pipeline_mode = #tpu.pipeline_mode<synchronous>, transform_indices = @transform_8, window_bounds = array<i64: 1, 128>}, {transform_indices = @transform_9, window_bounds = array<i64: 16, 128>}]} {
    %c0 = arith.constant 0 : index
    %c0_0 = arith.constant 0 : index
    %0 = vector.load %arg1[%c0, %c0_0] : memref<16x256xbf16, #tpu.memory_space<vmem>>, vector<16x256xbf16>
    %c0_1 = arith.constant 0 : index
    %c0_2 = arith.constant 0 : index
    %1 = vector.load %arg2[%c0_1, %c0_2] : memref<16x256xbf16, #tpu.memory_space<vmem>>, vector<16x256xbf16>
    %2 = arith.extf %0 : vector<16x256xbf16> to vector<16x256xf32>
    %3 = arith.mulf %2, %2 : vector<16x256xf32>
    %cst = arith.constant dense<0.000000e+00> : vector<16xf32>
    %4 = vector.multi_reduction <add>, %3, %cst [1] : vector<16x256xf32> to vector<16xf32>
    %5 = vector.shape_cast %4 : vector<16xf32> to vector<16x1xf32>
    %6 = arith.extf %1 : vector<16x256xbf16> to vector<16x256xf32>
    %7 = arith.mulf %6, %6 : vector<16x256xf32>
    %cst_3 = arith.constant dense<0.000000e+00> : vector<16xf32>
    %8 = vector.multi_reduction <add>, %7, %cst_3 [1] : vector<16x256xf32> to vector<16xf32>
    %9 = vector.shape_cast %8 : vector<16xf32> to vector<16x1xf32>
    %cst_4 = arith.constant 1.000000e-24 : f32
    %10 = vector.broadcast %cst_4 : f32 to vector<16x1xf32>
    %11 = arith.maximumf %5, %10 : vector<16x1xf32>
    %12 = math.rsqrt %11 : vector<16x1xf32>
    %13 = arith.truncf %12 : vector<16x1xf32> to vector<16x1xbf16>
    %14 = vector.broadcast %13 : vector<16x1xbf16> to vector<16x256xbf16>
    %15 = arith.mulf %0, %14 : vector<16x256xbf16>
    %cst_5 = arith.constant 1.000000e-24 : f32
    %16 = vector.broadcast %cst_5 : f32 to vector<16x1xf32>
    %17 = arith.maximumf %9, %16 : vector<16x1xf32>
    %18 = math.rsqrt %17 : vector<16x1xf32>
    %19 = arith.truncf %18 : vector<16x1xf32> to vector<16x1xbf16>
    %20 = vector.broadcast %19 : vector<16x1xbf16> to vector<16x256xbf16>
    %21 = arith.mulf %1, %20 : vector<16x256xbf16>
    %c0_6 = arith.constant 0 : index
    %c0_7 = arith.constant 0 : index
    %22 = vector.load %arg3[%c0_6, %c0_7] : memref<256x256xbf16, #tpu.memory_space<vmem>>, vector<256x256xbf16>
    %cst_8 = arith.constant dense<0.000000e+00> : vector<16x256xf32>
    %23 = tpu.matmul %15, %22, %cst_8 {dimension_numbers = #tpu.dot_dimension_numbers<[1], [0], [0], [1], [0, 0, 1, 1], [], []>} : vector<16x256xbf16>, vector<256x256xbf16>, vector<16x256xf32> -> vector<16x256xf32>
    %c0_9 = arith.constant 0 : index
    %c0_10 = arith.constant 0 : index
    %24 = vector.load %arg4[%c0_9, %c0_10] : memref<256x256xbf16, #tpu.memory_space<vmem>>, vector<256x256xbf16>
    %cst_11 = arith.constant dense<0.000000e+00> : vector<16x256xf32>
    %25 = tpu.matmul %21, %24, %cst_11 {dimension_numbers = #tpu.dot_dimension_numbers<[1], [0], [0], [1], [0, 0, 1, 1], [], []>} : vector<16x256xbf16>, vector<256x256xbf16>, vector<16x256xf32> -> vector<16x256xf32>
    %26 = arith.addf %23, %25 : vector<16x256xf32>
    %27 = arith.truncf %26 : vector<16x256xf32> to vector<16x256xbf16>
    %c0_12 = arith.constant 0 : index
    %c0_13 = arith.constant 0 : index
    %28 = vector.load %arg5[%c0_12, %c0_13] : memref<1x256xf32, #tpu.memory_space<vmem>>, vector<1x256xf32>
    %29 = arith.truncf %28 : vector<1x256xf32> to vector<1x256xbf16>
    %30 = vector.broadcast %29 : vector<1x256xbf16> to vector<16x256xbf16>
    %31 = arith.addf %27, %30 : vector<16x256xbf16>
    %cst_14 = arith.constant 0.000000e+00 : bf16
    %32 = vector.broadcast %cst_14 : bf16 to vector<16x256xbf16>
    %33 = arith.cmpf ogt, %31, %32 : vector<16x256xbf16>
    %34 = math.exp %31 : vector<16x256xbf16>
    %cst_15 = arith.constant 1.000000e+00 : bf16
    %35 = vector.broadcast %cst_15 : bf16 to vector<16x256xbf16>
    %36 = arith.subf %34, %35 : vector<16x256xbf16>
    %37 = arith.select %33, %31, %36 : vector<16x256xi1>, vector<16x256xbf16>
    %c0_16 = arith.constant 0 : index
    %c0_17 = arith.constant 0 : index
    %38 = vector.load %arg6[%c0_16, %c0_17] : memref<256x128xbf16, #tpu.memory_space<vmem>>, vector<256x128xbf16>
    %cst_18 = arith.constant dense<0.000000e+00> : vector<16x128xf32>
    %39 = tpu.matmul %37, %38, %cst_18 {dimension_numbers = #tpu.dot_dimension_numbers<[1], [0], [0], [1], [0, 0, 1, 1], [], []>} : vector<16x256xbf16>, vector<256x128xbf16>, vector<16x128xf32> -> vector<16x128xf32>
    %40 = arith.truncf %39 : vector<16x128xf32> to vector<16x128xbf16>
    %c0_19 = arith.constant 0 : index
    %c0_20 = arith.constant 0 : index
    %41 = vector.load %arg7[%c0_19, %c0_20] : memref<1x128xf32, #tpu.memory_space<vmem>>, vector<1x128xf32>
    %42 = arith.truncf %41 : vector<1x128xf32> to vector<1x128xbf16>
    %43 = vector.broadcast %42 : vector<1x128xbf16> to vector<16x128xbf16>
    %44 = arith.addf %40, %43 : vector<16x128xbf16>
    %cst_21 = arith.constant 0.000000e+00 : bf16
    %45 = vector.broadcast %cst_21 : bf16 to vector<16x128xbf16>
    %46 = arith.cmpf ogt, %44, %45 : vector<16x128xbf16>
    %47 = math.exp %44 : vector<16x128xbf16>
    %cst_22 = arith.constant 1.000000e+00 : bf16
    %48 = vector.broadcast %cst_22 : bf16 to vector<16x128xbf16>
    %49 = arith.subf %47, %48 : vector<16x128xbf16>
    %50 = arith.select %46, %44, %49 : vector<16x128xi1>, vector<16x128xbf16>
    %c0_23 = arith.constant 0 : index
    %c0_24 = arith.constant 0 : index
    %51 = vector.load %arg8[%c0_23, %c0_24] : memref<128x128xbf16, #tpu.memory_space<vmem>>, vector<128x128xbf16>
    %cst_25 = arith.constant dense<0.000000e+00> : vector<16x128xf32>
    %52 = tpu.matmul %50, %51, %cst_25 {dimension_numbers = #tpu.dot_dimension_numbers<[1], [0], [0], [1], [0, 0, 1, 1], [], []>} : vector<16x128xbf16>, vector<128x128xbf16>, vector<16x128xf32> -> vector<16x128xf32>
    %c0_26 = arith.constant 0 : index
    %c0_27 = arith.constant 0 : index
    %53 = vector.load %arg9[%c0_26, %c0_27] : memref<1x128xf32, #tpu.memory_space<vmem>>, vector<1x128xf32>
    %54 = vector.broadcast %53 : vector<1x128xf32> to vector<16x128xf32>
    %55 = arith.addf %52, %54 : vector<16x128xf32>
    %56 = arith.truncf %55 : vector<16x128xf32> to vector<16x128xbf16>
    %c0_28 = arith.constant 0 : index
    %c0_29 = arith.constant 0 : index
    %57 = vector.load %arg10[%c0_28, %c0_29] : memref<16x128xbf16, #tpu.memory_space<vmem>>, vector<16x128xbf16>
    tpu.vector_store %arg10[%c0_28, %c0_29], %56 {strides = array<i32>} : memref<16x128xbf16, #tpu.memory_space<vmem>>, vector<16x128xbf16>,
    return
  }
  func.func @transform_0(%arg0: i32) -> (i32, i32) {
    %c0_i32 = arith.constant 0 : i32
    %c0_i32_0 = arith.constant 0 : i32
    return %arg0, %c0_i32 : i32, i32
  }
  func.func @transform_1(%arg0: i32) -> (i32, i32) {
    %c0_i32 = arith.constant 0 : i32
    %c0_i32_0 = arith.constant 0 : i32
    return %arg0, %c0_i32 : i32, i32
  }
  func.func @transform_2(%arg0: i32) -> (i32, i32) {
    %c0_i32 = arith.constant 0 : i32
    %c0_i32_0 = arith.constant 0 : i32
    %c0_i32_1 = arith.constant 0 : i32
    return %c0_i32, %c0_i32_0 : i32, i32
  }
  func.func @transform_3(%arg0: i32) -> (i32, i32) {
    %c0_i32 = arith.constant 0 : i32
    %c0_i32_0 = arith.constant 0 : i32
    %c0_i32_1 = arith.constant 0 : i32
    return %c0_i32, %c0_i32_0 : i32, i32
  }
  func.func @transform_4(%arg0: i32) -> (i32, i32) {
    %c0_i32 = arith.constant 0 : i32
    %c0_i32_0 = arith.constant 0 : i32
    %c0_i32_1 = arith.constant 0 : i32
    return %c0_i32, %c0_i32_0 : i32, i32
  }
  func.func @transform_5(%arg0: i32) -> (i32, i32) {
    %c0_i32 = arith.constant 0 : i32
    %c0_i32_0 = arith.constant 0 : i32
    %c0_i32_1 = arith.constant 0 : i32
    return %c0_i32, %c0_i32_0 : i32, i32
  }
  func.func @transform_6(%arg0: i32) -> (i32, i32) {
    %c0_i32 = arith.constant 0 : i32
    %c0_i32_0 = arith.constant 0 : i32
    %c0_i32_1 = arith.constant 0 : i32
    return %c0_i32, %c0_i32_0 : i32, i32
  }
  func.func @transform_7(%arg0: i32) -> (i32, i32) {
    %c0_i32 = arith.constant 0 : i32
    %c0_i32_0 = arith.constant 0 : i32
    %c0_i32_1 = arith.constant 0 : i32
    return %c0_i32, %c0_i32_0 : i32, i32
  }
  func.func @transform_8(%arg0: i32) -> (i32, i32) {
    %c0_i32 = arith.constant 0 : i32
    %c0_i32_0 = arith.constant 0 : i32
    %c0_i32_1 = arith.constant 0 : i32
    return %c0_i32, %c0_i32_0 : i32, i32
  }
  func.func @transform_9(%arg0: i32) -> (i32, i32) {
    %c0_i32 = arith.constant 0 : i32
    %c0_i32_0 = arith.constant 0 : i32
    return %arg0, %c0_i32 : i32, i32
  }
}

</mosaic_0001>

<llo_original>
// kernel: tpu_custom_call.1
$region0: #{tpu_custom_call.1}
  #allocation0 [shape = 'u32[]', space=smem, size = 0x4, offset = 0x4, fixed_abs, tag = 'smem constant byte address 0x4 - core index']
  #allocation1 [shape = 'u32[144,128]{1,0:T(1,128)}', space=vmem, size = 0x12000, scoped, tag = 'internal scratch']
  %s0 = inlined_call_operand.hbm [shape: bf16[16,256], index: 0, kind: input, shape index: {}]
  %s1 = inlined_call_operand.hbm [shape: bf16[16,256], index: 1, kind: input, shape index: {}]
  %s2 = inlined_call_operand.hbm [shape: bf16[256,256], index: 2, kind: input, shape index: {}]
  %s3 = inlined_call_operand.hbm [shape: bf16[256,256], index: 3, kind: input, shape index: {}]
  %s4 = inlined_call_operand.vmem [shape: f32[1,256], index: 4, kind: input, shape index: {}]
  %s5 = inlined_call_operand.hbm [shape: bf16[256,128], index: 5, kind: input, shape index: {}]
  %s6 = inlined_call_operand.vmem [shape: f32[1,128], index: 6, kind: input, shape index: {}]
  %s7 = inlined_call_operand.hbm [shape: bf16[128,128], index: 7, kind: input, shape index: {}]
  %s8 = inlined_call_operand.vmem [shape: f32[1,128], index: 8, kind: input, shape index: {}]
  %s9 = inlined_call_operand.hbm [shape: bf16[16,128], index: 9, kind: output, shape index: {}]
  %s10 = sld [smem:[#allocation0]]
  $region70: #{tpu_custom_call.1} parent=0
    _
  %s12 = ssub.s32 1, %s10
  %s13 = scalar_select 0, %s12, %s10
  $region1: #{tpu_custom_call.1} parent=0
    #allocation2 [shape = 'u8[8192]{0}', space=vmem, size = 0x2000, scoped, tag = 'input window, operand 0, single buffered']
    #allocation3 [shape = 's32[1]{0}', space=sflag, size = 0x4, scoped, tag = 'scoped memory for tpu_custom_call.1']
    #allocation4 [shape = 's32[1]{0}', space=sflag, size = 0x4, scoped, tag = 'scoped memory for tpu_custom_call.1']
    #allocation5 [shape = 'u8[8192]{0}', space=vmem, size = 0x2000, scoped, tag = 'input window, operand 1, single buffered']
    #allocation6 [shape = 's32[1]{0}', space=sflag, size = 0x4, scoped, tag = 'scoped memory for tpu_custom_call.1']
    #allocation7 [shape = 'u8[131072]{0}', space=vmem, size = 0x20000, scoped, tag = 'input window, operand 2, single buffered']
    #allocation8 [shape = 'u8[131072]{0}', space=vmem, size = 0x20000, scoped, tag = 'input window, operand 3, single buffered']
    #allocation9 [shape = 's32[1]{0}', space=sflag, size = 0x4, scoped, tag = 'scoped memory for tpu_custom_call.1']
    #allocation10 [shape = 'u8[65536]{0}', space=vmem, size = 0x10000, scoped, tag = 'input window, operand 5, single buffered']
    #allocation11 [shape = 'u8[32768]{0}', space=vmem, size = 0x8000, scoped, tag = 'input window, operand 7, single buffered']
    #allocation12 [shape = 's32[1]{0}', space=sflag, size = 0x4, scoped, tag = 'scoped memory for tpu_custom_call.1']
    #allocation13 [shape = 'u8[4096]{0}', space=vmem, size = 0x1000, scoped, tag = 'output window, operand 0, single buffered']
    %14 = vsyncpa [#allocation3], 0
    %15 = vsyncpa [#allocation6], 0
    %16 = vsyncpa [#allocation9], 0
    %17 = vsyncpa [#allocation12], 0
    %18 = vsyncpa [#allocation4], 0
    // Predicated region
    $region2: #{tpu_custom_call.1} parent=1 // pred_check
      _
    $region3: #{tpu_custom_call.1} parent=1 // pred_check_branch
      %20 = sbr.rel (0) target = $region5
    $region4: #{tpu_custom_call.1} parent=1 // pred_region
      %s22 = ssub.s32 256, 256
      %23 = vsyncadd [#allocation3], %s22
      %s24 = sshll.u32 [#allocation2], 4
      %s25 = int_to_ptr.vmem [resolvable:$true] %s24
      %30 = dma.hbm_to_vmem [thread:$0]  %s0, 256, %s25, [#allocation3], 128, 128, 8
    $region5: #{tpu_custom_call.1} parent=1 // pred_fallthru
      _
    // Predicated region
    $region6: #{tpu_custom_call.1} parent=1 // pred_check
      _
    $region7: #{tpu_custom_call.1} parent=1 // pred_check_branch
      %32 = sbr.rel (0) target = $region9
    $region8: #{tpu_custom_call.1} parent=1 // pred_region
      %s34 = ssub.s32 256, 256
      %35 = vsyncadd [#allocation6], %s34
      %s36 = sshll.u32 [#allocation5], 4
      %s37 = int_to_ptr.vmem [resolvable:$true] %s36
      %42 = dma.hbm_to_vmem [thread:$0]  %s1, 256, %s37, [#allocation6], 128, 128, 8
    $region9: #{tpu_custom_call.1} parent=1 // pred_fallthru
      _
    // Predicated region
    $region10: #{tpu_custom_call.1} parent=1 // pred_check
      _
    $region11: #{tpu_custom_call.1} parent=1 // pred_check_branch
      %44 = sbr.rel (0) target = $region13
    $region12: #{tpu_custom_call.1} parent=1 // pred_region
      %s46 = ssub.s32 4096, 4096
      %47 = vsyncadd [#allocation6], %s46
      %s48 = sshll.u32 [#allocation7], 4
      %s49 = int_to_ptr.vmem [resolvable:$true] %s48
      %54 = dma.hbm_to_vmem [thread:$0]  %s2, 4096, %s49, [#allocation6], 128, 128, 8
    $region13: #{tpu_custom_call.1} parent=1 // pred_fallthru
      _
    // Predicated region
    $region14: #{tpu_custom_call.1} parent=1 // pred_check
      _
    $region15: #{tpu_custom_call.1} parent=1 // pred_check_branch
      %56 = sbr.rel (0) target = $region17
    $region16: #{tpu_custom_call.1} parent=1 // pred_region
      %s58 = ssub.s32 4096, 4096
      %59 = vsyncadd [#allocation9], %s58
      %s60 = sshll.u32 [#allocation8], 4
      %s61 = int_to_ptr.vmem [resolvable:$true] %s60
      %66 = dma.hbm_to_vmem [thread:$0]  %s3, 4096, %s61, [#allocation9], 128, 128, 8
    $region17: #{tpu_custom_call.1} parent=1 // pred_fallthru
      _
    // Predicated region
    $region18: #{tpu_custom_call.1} parent=1 // pred_check
      _
    $region19: #{tpu_custom_call.1} parent=1 // pred_check_branch
      %68 = sbr.rel (0) target = $region21
    $region20: #{tpu_custom_call.1} parent=1 // pred_region
      _
    $region21: #{tpu_custom_call.1} parent=1 // pred_fallthru
      _
    // Predicated region
    $region22: #{tpu_custom_call.1} parent=1 // pred_check
      _
    $region23: #{tpu_custom_call.1} parent=1 // pred_check_branch
      %70 = sbr.rel (0) target = $region25
    $region24: #{tpu_custom_call.1} parent=1 // pred_region
      %s72 = ssub.s32 2048, 2048
      %73 = vsyncadd [#allocation9], %s72
      %s74 = sshll.u32 [#allocation10], 4
      %s75 = int_to_ptr.vmem [resolvable:$true] %s74
      %80 = dma.hbm_to_vmem [thread:$0]  %s5, 2048, %s75, [#allocation9], 64, 64, 4
    $region25: #{tpu_custom_call.1} parent=1 // pred_fallthru
      _
    // Predicated region
    $region26: #{tpu_custom_call.1} parent=1 // pred_check
      _
    $region27: #{tpu_custom_call.1} parent=1 // pred_check_branch
      %82 = sbr.rel (0) target = $region29
    $region28: #{tpu_custom_call.1} parent=1 // pred_region
      _
    $region29: #{tpu_custom_call.1} parent=1 // pred_fallthru
      _
    // Predicated region
    $region30: #{tpu_custom_call.1} parent=1 // pred_check
      _
    $region31: #{tpu_custom_call.1} parent=1 // pred_check_branch
      %84 = sbr.rel (0) target = $region33
    $region32: #{tpu_custom_call.1} parent=1 // pred_region
      %s86 = ssub.s32 1024, 1024
      %87 = vsyncadd [#allocation12], %s86
      %s88 = sshll.u32 [#allocation11], 4
      %s89 = int_to_ptr.vmem [resolvable:$true] %s88
      %94 = dma.hbm_to_vmem [thread:$0]  %s7, 1024, %s89, [#allocation12], 64, 64, 4
    $region33: #{tpu_custom_call.1} parent=1 // pred_fallthru
      _
    // Predicated region
    $region34: #{tpu_custom_call.1} parent=1 // pred_check
      _
    $region35: #{tpu_custom_call.1} parent=1 // pred_check_branch
      %96 = sbr.rel (0) target = $region37
    $region36: #{tpu_custom_call.1} parent=1 // pred_region
      _
    $region37: #{tpu_custom_call.1} parent=1 // pred_fallthru
      _
    // Predicated region
    $region38: #{tpu_custom_call.1} parent=1 // pred_check
      _
    $region39: #{tpu_custom_call.1} parent=1 // pred_check_branch
      %98 = sbr.rel (0) target = $region41
    $region40: #{tpu_custom_call.1} parent=1 // pred_region
      %99 = dma.done [#allocation3], 256
    $region41: #{tpu_custom_call.1} parent=1 // pred_fallthru
      _
    // Predicated region
    $region42: #{tpu_custom_call.1} parent=1 // pred_check
      _
    $region43: #{tpu_custom_call.1} parent=1 // pred_check_branch
      %101 = sbr.rel (0) target = $region45
    $region44: #{tpu_custom_call.1} parent=1 // pred_region
      %102 = dma.done [#allocation6], 256
    $region45: #{tpu_custom_call.1} parent=1 // pred_fallthru
      _
    // Predicated region
    $region46: #{tpu_custom_call.1} parent=1 // pred_check
      _
    $region47: #{tpu_custom_call.1} parent=1 // pred_check_branch
      %104 = sbr.rel (0) target = $region49
    $region48: #{tpu_custom_call.1} parent=1 // pred_region
      %105 = dma.done [#allocation6], 4096
    $region49: #{tpu_custom_call.1} parent=1 // pred_fallthru
      _
    // Predicated region
    $region50: #{tpu_custom_call.1} parent=1 // pred_check
      _
    $region51: #{tpu_custom_call.1} parent=1 // pred_check_branch
      %107 = sbr.rel (0) target = $region53
    $region52: #{tpu_custom_call.1} parent=1 // pred_region
      %108 = dma.done [#allocation9], 4096
    $region53: #{tpu_custom_call.1} parent=1 // pred_fallthru
      _
    // Predicated region
    $region54: #{tpu_custom_call.1} parent=1 // pred_check
      _
    $region55: #{tpu_custom_call.1} parent=1 // pred_check_branch
      %110 = sbr.rel (0) target = $region57
    $region56: #{tpu_custom_call.1} parent=1 // pred_region
      %111 = dma.done [#allocation9], 2048
    $region57: #{tpu_custom_call.1} parent=1 // pred_fallthru
      _
    // Predicated region
    $region58: #{tpu_custom_call.1} parent=1 // pred_check
      _
    $region59: #{tpu_custom_call.1} parent=1 // pred_check_branch
      %113 = sbr.rel (0) target = $region61
    $region60: #{tpu_custom_call.1} parent=1 // pred_region
      %114 = dma.done [#allocation12], 1024
    $region61: #{tpu_custom_call.1} parent=1 // pred_fallthru
      _
    %v117 = vld [vmem:[#allocation2] sm:$0xff]
    %v118 = vld [vmem:[#allocation2 + $0x8] sm:$0xff]
    %v119 = vld [vmem:[#allocation5] sm:$0xff]
    %v120 = vld [vmem:[#allocation5 + $0x8] sm:$0xff]
    %v121 = vunpack.c.l.bf16 %v117
    %v122 = vunpack.c.h.bf16 %v117
    %v123 = vunpack.c.l.bf16 %v118
    %v124 = vunpack.c.h.bf16 %v118
    %v125 = vmul.f32 %v121, %v121
    %v126 = vmul.f32 %v122, %v122
    %v127 = vmul.f32 %v123, %v123
    %v128 = vmul.f32 %v124, %v124
    %v129 = vadd.f32 %v125, %v126
    %130 = vadd.xlane.f32.xlu0 %v129
    %v131 = vpop.xlane.xlu0 %130
    %v132 = vadd.f32 %v127, %v128
    %133 = vadd.xlane.f32.xlu0 %v132
    %v134 = vpop.xlane.xlu0 %133
    %v135 = vunpack.c.l.bf16 %v119
    %v136 = vunpack.c.h.bf16 %v119
    %v137 = vunpack.c.l.bf16 %v120
    %v138 = vunpack.c.h.bf16 %v120
    %v139 = vmul.f32 %v135, %v135
    %v140 = vmul.f32 %v136, %v136
    %v141 = vmul.f32 %v137, %v137
    %v142 = vmul.f32 %v138, %v138
    %v143 = vadd.f32 %v139, %v140
    %144 = vadd.xlane.f32.xlu0 %v143
    %v145 = vpop.xlane.xlu0 %144
    %v146 = vadd.f32 %v141, %v142
    %147 = vadd.xlane.f32.xlu0 %v146
    %v148 = vpop.xlane.xlu0 %147
    %v149 = vmax.f32 %v131, 1e-24
    %v150 = vmax.f32 %v134, 1e-24
    %v151 = vrsqrt.pop %v149
    %v152 = vrsqrt.pop %v150
    %v153 = vpack.c.bf16 %v152, %v151
    %v156 = vunpack.c.l.s4 839922192
    %v157 = vunpack.c.0.s8 %v156
    %v158 = vlaneseq
    %v159 = vshrl.u32 %v158, 7
    %v160 = vsub.s32 %v157, %v159
    %v161 = vrot.slane %v153, %v160
    %v163 = vunpack.c.l.s4 1985246804
    %v164 = vunpack.c.0.s8 %v163
    %v165 = vlaneseq
    %v166 = vshrl.u32 %v165, 7
    %v167 = vsub.s32 %v164, %v166
    %v168 = vrot.slane %v153, %v167
    %v171 = vmul.bf16 %v117, %v161
    %v172 = vmul.bf16 %v118, %v168
    %v173 = vmax.f32 %v145, 1e-24
    %v174 = vmax.f32 %v148, 1e-24
    %v175 = vrsqrt.pop %v173
    %v176 = vrsqrt.pop %v174
    %v177 = vpack.c.bf16 %v176, %v175
    %v180 = vunpack.c.l.s4 839922192
    %v181 = vunpack.c.0.s8 %v180
    %v182 = vlaneseq
    %v183 = vshrl.u32 %v182, 7
    %v184 = vsub.s32 %v181, %v183
    %v185 = vrot.slane %v177, %v184
    %v187 = vunpack.c.l.s4 1985246804
    %v188 = vunpack.c.0.s8 %v187
    %v189 = vlaneseq
    %v190 = vshrl.u32 %v189, 7
    %v191 = vsub.s32 %v188, %v190
    %v192 = vrot.slane %v177, %v191
    %v195 = vmul.bf16 %v119, %v185
    %v196 = vmul.bf16 %v120, %v192
    %v197 = vld [vmem:[#allocation7] sm:$0xff]
    %v198 = vld [vmem:[#allocation7 + $0x8] sm:$0xff]
    %v199 = vld [vmem:[#allocation7 + $0x10] sm:$0xff]
    %v200 = vld [vmem:[#allocation7 + $0x18] sm:$0xff]
    %v201 = vld [vmem:[#allocation7 + $0x20] sm:$0xff]
    %v202 = vld [vmem:[#allocation7 + $0x28] sm:$0xff]
    %v203 = vld [vmem:[#allocation7 + $0x30] sm:$0xff]
    %v204 = vld [vmem:[#allocation7 + $0x38] sm:$0xff]
    %v205 = vld [vmem:[#allocation7 + $0x40] sm:$0xff]
    %v206 = vld [vmem:[#allocation7 + $0x48] sm:$0xff]
    %v207 = vld [vmem:[#allocation7 + $0x50] sm:$0xff]
    %v208 = vld [vmem:[#allocation7 + $0x58] sm:$0xff]
    %v209 = vld [vmem:[#allocation7 + $0x60] sm:$0xff]
    %v210 = vld [vmem:[#allocation7 + $0x68] sm:$0xff]
    %v211 = vld [vmem:[#allocation7 + $0x70] sm:$0xff]
    %v212 = vld [vmem:[#allocation7 + $0x78] sm:$0xff]
    %v213 = vld [vmem:[#allocation7 + $0x80] sm:$0xff]
    %v214 = vld [vmem:[#allocation7 + $0x88] sm:$0xff]
    %v215 = vld [vmem:[#allocation7 + $0x90] sm:$0xff]
    %v216 = vld [vmem:[#allocation7 + $0x98] sm:$0xff]
    %v217 = vld [vmem:[#allocation7 + $0xa0] sm:$0xff]
    %v218 = vld [vmem:[#allocation7 + $0xa8] sm:$0xff]
    %v219 = vld [vmem:[#allocation7 + $0xb0] sm:$0xff]
    %v220 = vld [vmem:[#allocation7 + $0xb8] sm:$0xff]
    %v221 = vld [vmem:[#allocation7 + $0xc0] sm:$0xff]
    %v222 = vld [vmem:[#allocation7 + $0xc8] sm:$0xff]
    %v223 = vld [vmem:[#allocation7 + $0xd0] sm:$0xff]
    %v224 = vld [vmem:[#allocation7 + $0xd8] sm:$0xff]
    %v225 = vld [vmem:[#allocation7 + $0xe0] sm:$0xff]
    %v226 = vld [vmem:[#allocation7 + $0xe8] sm:$0xff]
    %v227 = vld [vmem:[#allocation7 + $0xf0] sm:$0xff]
    %v228 = vld [vmem:[#allocation7 + $0xf8] sm:$0xff]
    %v229 = vld [vmem:[#allocation8] sm:$0xff]
    %v230 = vld [vmem:[#allocation8 + $0x8] sm:$0xff]
    %v231 = vld [vmem:[#allocation8 + $0x10] sm:$0xff]
    %v232 = vld [vmem:[#allocation8 + $0x18] sm:$0xff]
    %v233 = vld [vmem:[#allocation8 + $0x20] sm:$0xff]
    %v234 = vld [vmem:[#allocation8 + $0x28] sm:$0xff]
    %v235 = vld [vmem:[#allocation8 + $0x30] sm:$0xff]
    %v236 = vld [vmem:[#allocation8 + $0x38] sm:$0xff]
    %v237 = vld [vmem:[#allocation8 + $0x40] sm:$0xff]
    %v238 = vld [vmem:[#allocation8 + $0x48] sm:$0xff]
    %v239 = vld [vmem:[#allocation8 + $0x50] sm:$0xff]
    %v240 = vld [vmem:[#allocation8 + $0x58] sm:$0xff]
    %v241 = vld [vmem:[#allocation8 + $0x60] sm:$0xff]
    %v242 = vld [vmem:[#allocation8 + $0x68] sm:$0xff]
    %v243 = vld [vmem:[#allocation8 + $0x70] sm:$0xff]
    %v244 = vld [vmem:[#allocation8 + $0x78] sm:$0xff]
    %v245 = vld [vmem:[#allocation8 + $0x80] sm:$0xff]
    %v246 = vld [vmem:[#allocation8 + $0x88] sm:$0xff]
    %v247 = vld [vmem:[#allocation8 + $0x90] sm:$0xff]
    %v248 = vld [vmem:[#allocation8 + $0x98] sm:$0xff]
    %v249 = vld [vmem:[#allocation8 + $0xa0] sm:$0xff]
    %v250 = vld [vmem:[#allocation8 + $0xa8] sm:$0xff]
    %v251 = vld [vmem:[#allocation8 + $0xb0] sm:$0xff]
    %v252 = vld [vmem:[#allocation8 + $0xb8] sm:$0xff]
    %v253 = vld [vmem:[#allocation8 + $0xc0] sm:$0xff]
    %v254 = vld [vmem:[#allocation8 + $0xc8] sm:$0xff]
    %v255 = vld [vmem:[#allocation8 + $0xd0] sm:$0xff]
    %v256 = vld [vmem:[#allocation8 + $0xd8] sm:$0xff]
    %v257 = vld [vmem:[#allocation8 + $0xe0] sm:$0xff]
    %v258 = vld [vmem:[#allocation8 + $0xe8] sm:$0xff]
    %v259 = vld [vmem:[#allocation8 + $0xf0] sm:$0xff]
    %v260 = vld [vmem:[#allocation8 + $0xf8] sm:$0xff]
    %v263 = vunpack.c.l.b16 %v195
    %v264 = vunpack.c.h.b16 %v195
    %v265 = vunpack.c.l.b16 %v196
    %v266 = vunpack.c.h.b16 %v196
    %v267 = vpack.c.b16 %v265, %v263
    %v268 = vpack.c.b16 %v266, %v264
    %v303 = vunpack.c.l.b16 %v229
    %v304 = vunpack.c.h.b16 %v229
    %v305 = vunpack.c.l.b16 %v230
    %v306 = vunpack.c.h.b16 %v230
    %v307 = vunpack.c.l.b16 %v231
    %v308 = vunpack.c.h.b16 %v231
    %v309 = vunpack.c.l.b16 %v232
    %v310 = vunpack.c.h.b16 %v232
    %v311 = vunpack.c.l.b16 %v233
    %v312 = vunpack.c.h.b16 %v233
    %v313 = vunpack.c.l.b16 %v234
    %v314 = vunpack.c.h.b16 %v234
    %v315 = vunpack.c.l.b16 %v235
    %v316 = vunpack.c.h.b16 %v235
    %v317 = vunpack.c.l.b16 %v236
    %v318 = vunpack.c.h.b16 %v236
    %v319 = vunpack.c.l.b16 %v237
    %v320 = vunpack.c.h.b16 %v237
    %v321 = vunpack.c.l.b16 %v238
    %v322 = vunpack.c.h.b16 %v238
    %v323 = vunpack.c.l.b16 %v239
    %v324 = vunpack.c.h.b16 %v239
    %v325 = vunpack.c.l.b16 %v240
    %v326 = vunpack.c.h.b16 %v240
    %v327 = vunpack.c.l.b16 %v241
    %v328 = vunpack.c.h.b16 %v241
    %v329 = vunpack.c.l.b16 %v242
    %v330 = vunpack.c.h.b16 %v242
    %v331 = vunpack.c.l.b16 %v243
    %v332 = vunpack.c.h.b16 %v243
    %v333 = vunpack.c.l.b16 %v244
    %v334 = vunpack.c.h.b16 %v244
    %v335 = vunpack.c.l.b16 %v245
    %v336 = vunpack.c.h.b16 %v245
    %v337 = vunpack.c.l.b16 %v246
    %v338 = vunpack.c.h.b16 %v246
    %v339 = vunpack.c.l.b16 %v247
    %v340 = vunpack.c.h.b16 %v247
    %v341 = vunpack.c.l.b16 %v248
    %v342 = vunpack.c.h.b16 %v248
    %v343 = vunpack.c.l.b16 %v249
    %v344 = vunpack.c.h.b16 %v249
    %v345 = vunpack.c.l.b16 %v250
    %v346 = vunpack.c.h.b16 %v250
    %v347 = vunpack.c.l.b16 %v251
    %v348 = vunpack.c.h.b16 %v251
    %v349 = vunpack.c.l.b16 %v252
    %v350 = vunpack.c.h.b16 %v252
    %v351 = vunpack.c.l.b16 %v253
    %v352 = vunpack.c.h.b16 %v253
    %v353 = vunpack.c.l.b16 %v254
    %v354 = vunpack.c.h.b16 %v254
    %v355 = vunpack.c.l.b16 %v255
    %v356 = vunpack.c.h.b16 %v255
    %v357 = vunpack.c.l.b16 %v256
    %v358 = vunpack.c.h.b16 %v256
    %v359 = vunpack.c.l.b16 %v257
    %v360 = vunpack.c.h.b16 %v257
    %v361 = vunpack.c.l.b16 %v258
    %v362 = vunpack.c.h.b16 %v258
    %v363 = vunpack.c.l.b16 %v259
    %v364 = vunpack.c.h.b16 %v259
    %v365 = vunpack.c.l.b16 %v260
    %v366 = vunpack.c.h.b16 %v260
    %v367 = vpack.c.b16 %v305, %v303
    %v368 = vpack.c.b16 %v306, %v304
    %v369 = vpack.c.b16 %v309, %v307
    %v370 = vpack.c.b16 %v310, %v308
    %v371 = vpack.c.b16 %v313, %v311
    %v372 = vpack.c.b16 %v314, %v312
    %v373 = vpack.c.b16 %v317, %v315
    %v374 = vpack.c.b16 %v318, %v316
    %v375 = vpack.c.b16 %v321, %v319
    %v376 = vpack.c.b16 %v322, %v320
    %v377 = vpack.c.b16 %v325, %v323
    %v378 = vpack.c.b16 %v326, %v324
    %v379 = vpack.c.b16 %v329, %v327
    %v380 = vpack.c.b16 %v330, %v328
    %v381 = vpack.c.b16 %v333, %v331
    %v382 = vpack.c.b16 %v334, %v332
    %v383 = vpack.c.b16 %v337, %v335
    %v384 = vpack.c.b16 %v338, %v336
    %v385 = vpack.c.b16 %v341, %v339
    %v386 = vpack.c.b16 %v342, %v340
    %v387 = vpack.c.b16 %v345, %v343
    %v388 = vpack.c.b16 %v346, %v344
    %v389 = vpack.c.b16 %v349, %v347
    %v390 = vpack.c.b16 %v350, %v348
    %v391 = vpack.c.b16 %v353, %v351
    %v392 = vpack.c.b16 %v354, %v352
    %v393 = vpack.c.b16 %v357, %v355
    %v394 = vpack.c.b16 %v358, %v356
    %v395 = vpack.c.b16 %v361, %v359
    %v396 = vpack.c.b16 %v362, %v360
    %v397 = vpack.c.b16 %v365, %v363
    %v398 = vpack.c.b16 %v366, %v364
    %431 = vmatprep.subr.bf16.mxu0 %v368
    %432 = vmatpush1.bf16.msra.mxu0 %v367
    %433 = vmatprep.subr.bf16.mxu0 %v370
    %434 = vmatpush1.bf16.msra.mxu0 %v369
    %435 = vmatprep.subr.bf16.mxu0 %v372
    %436 = vmatpush1.bf16.msra.mxu0 %v371
    %437 = vmatprep.subr.bf16.mxu0 %v374
    %438 = vmatpush1.bf16.msra.mxu0 %v373
    %439 = vmatprep.subr.bf16.mxu0 %v376
    %440 = vmatpush1.bf16.msra.mxu0 %v375
    %441 = vmatprep.subr.bf16.mxu0 %v378
    %442 = vmatpush1.bf16.msra.mxu0 %v377
    %443 = vmatprep.subr.bf16.mxu0 %v380
    %444 = vmatpush1.bf16.msra.mxu0 %v379
    %445 = vmatprep.subr.bf16.mxu0 %v382
    %446 = vmatpush1.bf16.msra.mxu0 %v381
    %447 = vmatprep.subr.bf16.mxu0 %v384
    %448 = vmatpush1.bf16.msra.mxu0 %v383
    %449 = vmatprep.subr.bf16.mxu0 %v386
    %450 = vmatpush1.bf16.msra.mxu0 %v385
    %451 = vmatprep.subr.bf16.mxu0 %v388
    %452 = vmatpush1.bf16.msra.mxu0 %v387
    %453 = vmatprep.subr.bf16.mxu0 %v390
    %454 = vmatpush1.bf16.msra.mxu0 %v389
    %455 = vmatprep.subr.bf16.mxu0 %v392
    %456 = vmatpush1.bf16.msra.mxu0 %v391
    %457 = vmatprep.subr.bf16.mxu0 %v394
    %458 = vmatpush1.bf16.msra.mxu0 %v393
    %459 = vmatprep.subr.bf16.mxu0 %v396
    %460 = vmatpush1.bf16.msra.mxu0 %v395
    %461 = vmatprep.subr.bf16.mxu0 %v398
    %462 = vmatpush1.bf16.msra.mxu0 %v397
    %463 = vmatprep.mubr.bf16.mxu0 %v268
    %464 = vmatmul.mubr.bf16.gmra.mrb[0].mxu0 %v267
    %v465 = vpop.f32.mrb[0].mxu0
    %v466 = vadd.f32 0.0, %v465
    %v467 = vpop.f32.mrb[0].mxu0
    %v468 = vadd.f32 0.0, %v467
    %v469 = vpop.f32.mrb[0].mxu0
    %v470 = vadd.f32 0.0, %v469
    %v471 = vpop.f32.mrb[0].mxu0
    %v472 = vadd.f32 0.0, %v471
    %473 = vdwg.mxu0
    %v476 = vunpack.c.l.b16 %v171
    %v477 = vunpack.c.h.b16 %v171
    %v478 = vunpack.c.l.b16 %v172
    %v479 = vunpack.c.h.b16 %v172
    %v480 = vpack.c.b16 %v478, %v476
    %v481 = vpack.c.b16 %v479, %v477
    %v516 = vunpack.c.l.b16 %v197
    %v517 = vunpack.c.h.b16 %v197
    %v518 = vunpack.c.l.b16 %v198
    %v519 = vunpack.c.h.b16 %v198
    %v520 = vunpack.c.l.b16 %v199
    %v521 = vunpack.c.h.b16 %v199
    %v522 = vunpack.c.l.b16 %v200
    %v523 = vunpack.c.h.b16 %v200
    %v524 = vunpack.c.l.b16 %v201
    %v525 = vunpack.c.h.b16 %v201
    %v526 = vunpack.c.l.b16 %v202
    %v527 = vunpack.c.h.b16 %v202
    %v528 = vunpack.c.l.b16 %v203
    %v529 = vunpack.c.h.b16 %v203
    %v530 = vunpack.c.l.b16 %v204
    %v531 = vunpack.c.h.b16 %v204
    %v532 = vunpack.c.l.b16 %v205
    %v533 = vunpack.c.h.b16 %v205
    %v534 = vunpack.c.l.b16 %v206
    %v535 = vunpack.c.h.b16 %v206
    %v536 = vunpack.c.l.b16 %v207
    %v537 = vunpack.c.h.b16 %v207
    %v538 = vunpack.c.l.b16 %v208
    %v539 = vunpack.c.h.b16 %v208
    %v540 = vunpack.c.l.b16 %v209
    %v541 = vunpack.c.h.b16 %v209
    %v542 = vunpack.c.l.b16 %v210
    %v543 = vunpack.c.h.b16 %v210
    %v544 = vunpack.c.l.b16 %v211
    %v545 = vunpack.c.h.b16 %v211
    %v546 = vunpack.c.l.b16 %v212
    %v547 = vunpack.c.h.b16 %v212
    %v548 = vunpack.c.l.b16 %v213
    %v549 = vunpack.c.h.b16 %v213
    %v550 = vunpack.c.l.b16 %v214
    %v551 = vunpack.c.h.b16 %v214
    %v552 = vunpack.c.l.b16 %v215
    %v553 = vunpack.c.h.b16 %v215
    %v554 = vunpack.c.l.b16 %v216
    %v555 = vunpack.c.h.b16 %v216
    %v556 = vunpack.c.l.b16 %v217
    %v557 = vunpack.c.h.b16 %v217
    %v558 = vunpack.c.l.b16 %v218
    %v559 = vunpack.c.h.b16 %v218
    %v560 = vunpack.c.l.b16 %v219
    %v561 = vunpack.c.h.b16 %v219
    %v562 = vunpack.c.l.b16 %v220
    %v563 = vunpack.c.h.b16 %v220
    %v564 = vunpack.c.l.b16 %v221
    %v565 = vunpack.c.h.b16 %v221
    %v566 = vunpack.c.l.b16 %v222
    %v567 = vunpack.c.h.b16 %v222
    %v568 = vunpack.c.l.b16 %v223
    %v569 = vunpack.c.h.b16 %v223
    %v570 = vunpack.c.l.b16 %v224
    %v571 = vunpack.c.h.b16 %v224
    %v572 = vunpack.c.l.b16 %v225
    %v573 = vunpack.c.h.b16 %v225
    %v574 = vunpack.c.l.b16 %v226
    %v575 = vunpack.c.h.b16 %v226
    %v576 = vunpack.c.l.b16 %v227
    %v577 = vunpack.c.h.b16 %v227
    %v578 = vunpack.c.l.b16 %v228
    %v579 = vunpack.c.h.b16 %v228
    %v580 = vpack.c.b16 %v518, %v516
    %v581 = vpack.c.b16 %v519, %v517
    %v582 = vpack.c.b16 %v522, %v520
    %v583 = vpack.c.b16 %v523, %v521
    %v584 = vpack.c.b16 %v526, %v524
    %v585 = vpack.c.b16 %v527, %v525
    %v586 = vpack.c.b16 %v530, %v528
    %v587 = vpack.c.b16 %v531, %v529
    %v588 = vpack.c.b16 %v534, %v532
    %v589 = vpack.c.b16 %v535, %v533
    %v590 = vpack.c.b16 %v538, %v536
    %v591 = vpack.c.b16 %v539, %v537
    %v592 = vpack.c.b16 %v542, %v540
    %v593 = vpack.c.b16 %v543, %v541
    %v594 = vpack.c.b16 %v546, %v544
    %v595 = vpack.c.b16 %v547, %v545
    %v596 = vpack.c.b16 %v550, %v548
    %v597 = vpack.c.b16 %v551, %v549
    %v598 = vpack.c.b16 %v554, %v552
    %v599 = vpack.c.b16 %v555, %v553
    %v600 = vpack.c.b16 %v558, %v556
    %v601 = vpack.c.b16 %v559, %v557
    %v602 = vpack.c.b16 %v562, %v560
    %v603 = vpack.c.b16 %v563, %v561
    %v604 = vpack.c.b16 %v566, %v564
    %v605 = vpack.c.b16 %v567, %v565
    %v606 = vpack.c.b16 %v570, %v568
    %v607 = vpack.c.b16 %v571, %v569
    %v608 = vpack.c.b16 %v574, %v572
    %v609 = vpack.c.b16 %v575, %v573
    %v610 = vpack.c.b16 %v578, %v576
    %v611 = vpack.c.b16 %v579, %v577
    %644 = vmatprep.subr.bf16.mxu0 %v581
    %645 = vmatpush1.bf16.msra.mxu0 %v580
    %646 = vmatprep.subr.bf16.mxu0 %v583
    %647 = vmatpush1.bf16.msra.mxu0 %v582
    %648 = vmatprep.subr.bf16.mxu0 %v585
    %649 = vmatpush1.bf16.msra.mxu0 %v584
    %650 = vmatprep.subr.bf16.mxu0 %v587
    %651 = vmatpush1.bf16.msra.mxu0 %v586
    %652 = vmatprep.subr.bf16.mxu0 %v589
    %653 = vmatpush1.bf16.msra.mxu0 %v588
    %654 = vmatprep.subr.bf16.mxu0 %v591
    %655 = vmatpush1.bf16.msra.mxu0 %v590
    %656 = vmatprep.subr.bf16.mxu0 %v593
    %657 = vmatpush1.bf16.msra.mxu0 %v592
    %658 = vmatprep.subr.bf16.mxu0 %v595
    %659 = vmatpush1.bf16.msra.mxu0 %v594
    %660 = vmatprep.subr.bf16.mxu0 %v597
    %661 = vmatpush1.bf16.msra.mxu0 %v596
    %662 = vmatprep.subr.bf16.mxu0 %v599
    %663 = vmatpush1.bf16.msra.mxu0 %v598
    %664 = vmatprep.subr.bf16.mxu0 %v601
    %665 = vmatpush1.bf16.msra.mxu0 %v600
    %666 = vmatprep.subr.bf16.mxu0 %v603
    %667 = vmatpush1.bf16.msra.mxu0 %v602
    %668 = vmatprep.subr.bf16.mxu0 %v605
    %669 = vmatpush1.bf16.msra.mxu0 %v604
    %670 = vmatprep.subr.bf16.mxu0 %v607
    %671 = vmatpush1.bf16.msra.mxu0 %v606
    %672 = vmatprep.subr.bf16.mxu0 %v609
    %673 = vmatpush1.bf16.msra.mxu0 %v608
    %674 = vmatprep.subr.bf16.mxu0 %v611
    %675 = vmatpush1.bf16.msra.mxu0 %v610
    %676 = vmatprep.mubr.bf16.mxu0 %v481
    %677 = vmatmul.mubr.bf16.gmra.mrb[0].mxu0 %v480
    %v678 = vpop.f32.mrb[0].mxu0
    %v679 = vadd.f32 %v466, %v678
    %v680 = vpop.f32.mrb[0].mxu0
    %v681 = vadd.f32 %v468, %v680
    %v682 = vpop.f32.mrb[0].mxu0
    %v683 = vadd.f32 %v470, %v682
    %v684 = vpop.f32.mrb[0].mxu0
    %v685 = vadd.f32 %v472, %v684
    %686 = vdwg.mxu0
    %v687 = vpack.c.bf16 %v683, %v679
    %v688 = vpack.c.bf16 %v685, %v681
    %v689 = vld [vmem:[%s4] sm:$0x3]
    %v691 = vlaneseq
    %v692 = vshrl.u32 %v691, 7
    %v693 = vsub.s32 0, %v692
    %v694 = vrot.slane %v689, %v693
    %v695 = vlaneseq
    %v696 = vshrl.u32 %v695, 7
    %v697 = vsub.s32 1, %v696
    %v698 = vrot.slane %v689, %v697
    %v701 = vpack.c.bf16 %v694, %v694
    %v702 = vpack.c.bf16 %v698, %v698
    %v704 = vpack.i.b16 %v701, %v701
    %v706 = vlaneseq
    %v707 = vshrl.u32 %v706, 7
    %v708 = vsub.s32 0, %v707
    %v709 = vrot.slane %v704, %v708
    %v711 = vpack.i.b16 %v702, %v702
    %v713 = vlaneseq
    %v714 = vshrl.u32 %v713, 7
    %v715 = vsub.s32 0, %v714
    %v716 = vrot.slane %v711, %v715
    %v717 = vadd.bf16 %v687, %v709
    %v718 = vadd.bf16 %v688, %v716
    %vm719 = vcmp.gt.bf16.partialorder %v717, 0
    %vm720 = vcmp.gt.bf16.partialorder %v718, 0
    %v722 = vmul.bf16 %v717, 1069105081
    %v723 = vpow.bf16.pop %v722
    %v725 = vmul.bf16 %v718, 1069105081
    %v726 = vpow.bf16.pop %v725
    %v727 = vsub.bf16 %v723, 1065369472
    %v728 = vsub.bf16 %v726, 1065369472
    %v729 = vsel %vm719, %v717, %v727
    %v730 = vsel %vm720, %v718, %v728
    %v731 = vld [vmem:[#allocation10] sm:$0xf]
    %v732 = vld [vmem:[#allocation10 + $0x4] sm:$0xf]
    %v733 = vld [vmem:[#allocation10 + $0x8] sm:$0xf]
    %v734 = vld [vmem:[#allocation10 + $0xc] sm:$0xf]
    %v735 = vld [vmem:[#allocation10 + $0x10] sm:$0xf]
    %v736 = vld [vmem:[#allocation10 + $0x14] sm:$0xf]
    %v737 = vld [vmem:[#allocation10 + $0x18] sm:$0xf]
    %v738 = vld [vmem:[#allocation10 + $0x1c] sm:$0xf]
    %v739 = vld [vmem:[#allocation10 + $0x20] sm:$0xf]
    %v740 = vld [vmem:[#allocation10 + $0x24] sm:$0xf]
    %v741 = vld [vmem:[#allocation10 + $0x28] sm:$0xf]
    %v742 = vld [vmem:[#allocation10 + $0x2c] sm:$0xf]
    %v743 = vld [vmem:[#allocation10 + $0x30] sm:$0xf]
    %v744 = vld [vmem:[#allocation10 + $0x34] sm:$0xf]
    %v745 = vld [vmem:[#allocation10 + $0x38] sm:$0xf]
    %v746 = vld [vmem:[#allocation10 + $0x3c] sm:$0xf]
    %v747 = vld [vmem:[#allocation10 + $0x40] sm:$0xf]
    %v748 = vld [vmem:[#allocation10 + $0x44] sm:$0xf]
    %v749 = vld [vmem:[#allocation10 + $0x48] sm:$0xf]
    %v750 = vld [vmem:[#allocation10 + $0x4c] sm:$0xf]
    %v751 = vld [vmem:[#allocation10 + $0x50] sm:$0xf]
    %v752 = vld [vmem:[#allocation10 + $0x54] sm:$0xf]
    %v753 = vld [vmem:[#allocation10 + $0x58] sm:$0xf]
    %v754 = vld [vmem:[#allocation10 + $0x5c] sm:$0xf]
    %v755 = vld [vmem:[#allocation10 + $0x60] sm:$0xf]
    %v756 = vld [vmem:[#allocation10 + $0x64] sm:$0xf]
    %v757 = vld [vmem:[#allocation10 + $0x68] sm:$0xf]
    %v758 = vld [vmem:[#allocation10 + $0x6c] sm:$0xf]
    %v759 = vld [vmem:[#allocation10 + $0x70] sm:$0xf]
    %v760 = vld [vmem:[#allocation10 + $0x74] sm:$0xf]
    %v761 = vld [vmem:[#allocation10 + $0x78] sm:$0xf]
    %v762 = vld [vmem:[#allocation10 + $0x7c] sm:$0xf]
    %v795 = vunpack.c.l.b16 %v731
    %v796 = vunpack.c.l.b16 %v732
    %v797 = vunpack.c.l.b16 %v733
    %v798 = vunpack.c.l.b16 %v734
    %v799 = vunpack.c.l.b16 %v735
    %v800 = vunpack.c.l.b16 %v736
    %v801 = vunpack.c.l.b16 %v737
    %v802 = vunpack.c.l.b16 %v738
    %v803 = vunpack.c.l.b16 %v739
    %v804 = vunpack.c.l.b16 %v740
    %v805 = vunpack.c.l.b16 %v741
    %v806 = vunpack.c.l.b16 %v742
    %v807 = vunpack.c.l.b16 %v743
    %v808 = vunpack.c.l.b16 %v744
    %v809 = vunpack.c.l.b16 %v745
    %v810 = vunpack.c.l.b16 %v746
    %v811 = vunpack.c.l.b16 %v747
    %v812 = vunpack.c.l.b16 %v748
    %v813 = vunpack.c.l.b16 %v749
    %v814 = vunpack.c.l.b16 %v750
    %v815 = vunpack.c.l.b16 %v751
    %v816 = vunpack.c.l.b16 %v752
    %v817 = vunpack.c.l.b16 %v753
    %v818 = vunpack.c.l.b16 %v754
    %v819 = vunpack.c.l.b16 %v755
    %v820 = vunpack.c.l.b16 %v756
    %v821 = vunpack.c.l.b16 %v757
    %v822 = vunpack.c.l.b16 %v758
    %v823 = vunpack.c.l.b16 %v759
    %v824 = vunpack.c.l.b16 %v760
    %v825 = vunpack.c.l.b16 %v761
    %v826 = vunpack.c.l.b16 %v762
    %v827 = vpack.c.b16 %v796, %v795
    %v828 = vpack.c.b16 %v798, %v797
    %v829 = vpack.c.b16 %v800, %v799
    %v830 = vpack.c.b16 %v802, %v801
    %v831 = vpack.c.b16 %v804, %v803
    %v832 = vpack.c.b16 %v806, %v805
    %v833 = vpack.c.b16 %v808, %v807
    %v834 = vpack.c.b16 %v810, %v809
    %v835 = vpack.c.b16 %v812, %v811
    %v836 = vpack.c.b16 %v814, %v813
    %v837 = vpack.c.b16 %v816, %v815
    %v838 = vpack.c.b16 %v818, %v817
    %v839 = vpack.c.b16 %v820, %v819
    %v840 = vpack.c.b16 %v822, %v821
    %v841 = vpack.c.b16 %v824, %v823
    %v842 = vpack.c.b16 %v826, %v825
    %859 = vmatprep.subr.bf16.mxu0 0
    %860 = vmatpush1.bf16.msra.mxu0 %v827
    %861 = vmatprep.subr.bf16.mxu0 0
    %862 = vmatpush1.bf16.msra.mxu0 %v828
    %863 = vmatprep.subr.bf16.mxu0 0
    %864 = vmatpush1.bf16.msra.mxu0 %v829
    %865 = vmatprep.subr.bf16.mxu0 0
    %866 = vmatpush1.bf16.msra.mxu0 %v830
    %867 = vmatprep.subr.bf16.mxu0 0
    %868 = vmatpush1.bf16.msra.mxu0 %v831
    %869 = vmatprep.subr.bf16.mxu0 0
    %870 = vmatpush1.bf16.msra.mxu0 %v832
    %871 = vmatprep.subr.bf16.mxu0 0
    %872 = vmatpush1.bf16.msra.mxu0 %v833
    %873 = vmatprep.subr.bf16.mxu0 0
    %874 = vmatpush1.bf16.msra.mxu0 %v834
    %875 = vmatprep.subr.bf16.mxu0 0
    %876 = vmatpush1.bf16.msra.mxu0 %v835
    %877 = vmatprep.subr.bf16.mxu0 0
    %878 = vmatpush1.bf16.msra.mxu0 %v836
    %879 = vmatprep.subr.bf16.mxu0 0
    %880 = vmatpush1.bf16.msra.mxu0 %v837
    %881 = vmatprep.subr.bf16.mxu0 0
    %882 = vmatpush1.bf16.msra.mxu0 %v838
    %883 = vmatprep.subr.bf16.mxu0 0
    %884 = vmatpush1.bf16.msra.mxu0 %v839
    %885 = vmatprep.subr.bf16.mxu0 0
    %886 = vmatpush1.bf16.msra.mxu0 %v840
    %887 = vmatprep.subr.bf16.mxu0 0
    %888 = vmatpush1.bf16.msra.mxu0 %v841
    %889 = vmatprep.subr.bf16.mxu0 0
    %890 = vmatpush1.bf16.msra.mxu0 %v842
    %891 = vmatprep.mubr.bf16.mxu0 %v730
    %892 = vmatmul.mubr.bf16.gmra.mrb[0].mxu0 %v729
    %v893 = vpop.f32.mrb[0].mxu0
    %v894 = vadd.f32 0.0, %v893
    %v895 = vpop.f32.mrb[0].mxu0
    %v896 = vpop.f32.mrb[0].mxu0
    %v897 = vadd.f32 0.0, %v896
    %v898 = vpop.f32.mrb[0].mxu0
    %899 = vdwg.mxu0
    %v900 = vpack.c.bf16 %v897, %v894
    %v901 = vld [vmem:[%s6] sm:$0x1]
    %v902 = vpack.c.bf16 %v901, %v901
    %v904 = vpack.i.b16 %v902, %v902
    %v906 = vlaneseq
    %v907 = vshrl.u32 %v906, 7
    %v908 = vsub.s32 0, %v907
    %v909 = vrot.slane %v904, %v908
    %v910 = vadd.bf16 %v900, %v909
    %vm911 = vcmp.gt.bf16.partialorder %v910, 0
    %v913 = vmul.bf16 %v910, 1069105081
    %v914 = vpow.bf16.pop %v913
    %v915 = vsub.bf16 %v914, 1065369472
    %v916 = vsel %vm911, %v910, %v915
    %v917 = vld [vmem:[#allocation11] sm:$0xf]
    %v918 = vld [vmem:[#allocation11 + $0x4] sm:$0xf]
    %v919 = vld [vmem:[#allocation11 + $0x8] sm:$0xf]
    %v920 = vld [vmem:[#allocation11 + $0xc] sm:$0xf]
    %v921 = vld [vmem:[#allocation11 + $0x10] sm:$0xf]
    %v922 = vld [vmem:[#allocation11 + $0x14] sm:$0xf]
    %v923 = vld [vmem:[#allocation11 + $0x18] sm:$0xf]
    %v924 = vld [vmem:[#allocation11 + $0x1c] sm:$0xf]
    %v925 = vld [vmem:[#allocation11 + $0x20] sm:$0xf]
    %v926 = vld [vmem:[#allocation11 + $0x24] sm:$0xf]
    %v927 = vld [vmem:[#allocation11 + $0x28] sm:$0xf]
    %v928 = vld [vmem:[#allocation11 + $0x2c] sm:$0xf]
    %v929 = vld [vmem:[#allocation11 + $0x30] sm:$0xf]
    %v930 = vld [vmem:[#allocation11 + $0x34] sm:$0xf]
    %v931 = vld [vmem:[#allocation11 + $0x38] sm:$0xf]
    %v932 = vld [vmem:[#allocation11 + $0x3c] sm:$0xf]
    %v933 = vld [vmem:[%s8] sm:$0x1]
    %v935 = vlaneseq
    %v936 = vshrl.u32 %v935, 7
    %v937 = vsub.s32 0, %v936
    %v938 = vrot.slane %v933, %v937
    %v956 = vunpack.c.l.b16 %v917
    %v957 = vunpack.c.l.b16 %v918
    %v958 = vunpack.c.l.b16 %v919
    %v959 = vunpack.c.l.b16 %v920
    %v960 = vunpack.c.l.b16 %v921
    %v961 = vunpack.c.l.b16 %v922
    %v962 = vunpack.c.l.b16 %v923
    %v963 = vunpack.c.l.b16 %v924
    %v964 = vunpack.c.l.b16 %v925
    %v965 = vunpack.c.l.b16 %v926
    %v966 = vunpack.c.l.b16 %v927
    %v967 = vunpack.c.l.b16 %v928
    %v968 = vunpack.c.l.b16 %v929
    %v969 = vunpack.c.l.b16 %v930
    %v970 = vunpack.c.l.b16 %v931
    %v971 = vunpack.c.l.b16 %v932
    %v972 = vpack.c.b16 %v957, %v956
    %v973 = vpack.c.b16 %v959, %v958
    %v974 = vpack.c.b16 %v961, %v960
    %v975 = vpack.c.b16 %v963, %v962
    %v976 = vpack.c.b16 %v965, %v964
    %v977 = vpack.c.b16 %v967, %v966
    %v978 = vpack.c.b16 %v969, %v968
    %v979 = vpack.c.b16 %v971, %v970
    %988 = vmatprep.subr.bf16.mxu0 0
    %989 = vmatpush1.bf16.msra.mxu0 %v972
    %990 = vmatprep.subr.bf16.mxu0 0
    %991 = vmatpush1.bf16.msra.mxu0 %v973
    %992 = vmatprep.subr.bf16.mxu0 0
    %993 = vmatpush1.bf16.msra.mxu0 %v974
    %994 = vmatprep.subr.bf16.mxu0 0
    %995 = vmatpush1.bf16.msra.mxu0 %v975
    %996 = vmatprep.subr.bf16.mxu0 0
    %997 = vmatpush1.bf16.msra.mxu0 %v976
    %998 = vmatprep.subr.bf16.mxu0 0
    %999 = vmatpush1.bf16.msra.mxu0 %v977
    %1000 = vmatprep.subr.bf16.mxu0 0
    %1001 = vmatpush1.bf16.msra.mxu0 %v978
    %1002 = vmatprep.subr.bf16.mxu0 0
    %1003 = vmatpush1.bf16.msra.mxu0 %v979
    %1004 = vmatprep.subr.bf16.mxu0 0
    %1005 = vmatpush1.bf16.msra.mxu0 0
    %1006 = vmatprep.subr.bf16.mxu0 0
    %1007 = vmatpush1.bf16.msra.mxu0 0
    %1008 = vmatprep.subr.bf16.mxu0 0
    %1009 = vmatpush1.bf16.msra.mxu0 0
    %1010 = vmatprep.subr.bf16.mxu0 0
    %1011 = vmatpush1.bf16.msra.mxu0 0
    %1012 = vmatprep.subr.bf16.mxu0 0
    %1013 = vmatpush1.bf16.msra.mxu0 0
    %1014 = vmatprep.subr.bf16.mxu0 0
    %1015 = vmatpush1.bf16.msra.mxu0 0
    %1016 = vmatprep.subr.bf16.mxu0 0
    %1017 = vmatpush1.bf16.msra.mxu0 0
    %1018 = vmatprep.subr.bf16.mxu0 0
    %1019 = vmatpush1.bf16.msra.mxu0 0
    %1020 = vmatprep.mubr.bf16.mxu0 0
    %1021 = vmatmul.mubr.bf16.gmra.mrb[0].mxu0 %v916
    %v1022 = vpop.f32.mrb[0].mxu0
    %v1023 = vadd.f32 %v938, %v1022
    %v1024 = vpop.f32.mrb[0].mxu0
    %v1025 = vpop.f32.mrb[0].mxu0
    %v1026 = vadd.f32 %v938, %v1025
    %v1027 = vpop.f32.mrb[0].mxu0
    %1028 = vdwg.mxu0
    %v1029 = vpack.c.bf16 %v1026, %v1023
    %v1031 = vunpack.c.l.b16 %v1029
    %v1032 = vunpack.c.h.b16 %v1029
    %v1033 = vpack.c.b16 %v1031, %v1031
    %v1034 = vpack.c.b16 %v1032, %v1032
    %1037 = vst [vmem:[#allocation13] sm:$0xf] %v1033
    %1038 = vst [vmem:[#allocation13 + $0x4] sm:$0xf] %v1034
    // Predicated region
    $region62: #{tpu_custom_call.1} parent=1 // pred_check
      _
    $region63: #{tpu_custom_call.1} parent=1 // pred_check_branch
      %1040 = sbr.rel (0) target = $region65
    $region64: #{tpu_custom_call.1} parent=1 // pred_region
      %s1042 = ssub.s32 128, 128
      %1043 = vsyncadd [#allocation4], %s1042
      %s1044 = sshll.u32 [#allocation13], 4
      %s1045 = int_to_ptr.vmem [resolvable:$true] %s1044
      %1050 = dma.vmem_to_hbm [thread:$0]  %s1045, 128, %s9, [#allocation4], 64, 64, 4
    $region65: #{tpu_custom_call.1} parent=1 // pred_fallthru
      _
    // Predicated region
    $region66: #{tpu_custom_call.1} parent=1 // pred_check
      _
    $region67: #{tpu_custom_call.1} parent=1 // pred_check_branch
      %1052 = sbr.rel (0) target = $region69
    $region68: #{tpu_custom_call.1} parent=1 // pred_region
      %1053 = dma.done [#allocation4], 128
    $region69: #{tpu_custom_call.1} parent=1 // pred_fallthru
      _
    %1054 = vsyncpa [#allocation3], 1
    %1055 = vsyncpa [#allocation6], 1
    %1056 = vsyncpa [#allocation9], 1
    %1057 = vsyncpa [#allocation12], 1
    %1058 = vsyncpa [#allocation4], 1

</llo_original>
